<compile_context>
chip_gen: v7x
topology: tpu7x:2x2x1
jax: 0.10.0
libtpu: 0.0.40
codegen_flags: <defaults>
</compile_context>

<pallas_src>
import jax
import jax.numpy as jnp
from jax.experimental import pallas as pl
from jax.experimental.pallas import tpu as pltpu


def _round_up(x: int, m: int) -> int:
    return ((x + m - 1) // m) * m


def _vmem_budget() -> int:
    """Generation-aware VMEM budget (bytes): ~75% of physical capacity."""
    try:
        cap = pltpu.get_tpu_info().vmem_capacity_bytes
    except Exception:
        cap = 64 * 1024 * 1024  # v7x-safe fallback (< physical on all gens)
    return int(cap * 3 // 4)


def _pick_tile_m(n_agents: int, in_dim: int, hid_p: int, out_dim: int,
                 out_bytes: int, budget: int, cap: int) -> int:
    """Largest agent tile that fits the VMEM budget (incl. activations)."""
    # Resident, single-buffered weights + biases (pipeline_mode=Buffered(1)).
    weight_bytes = (in_dim * hid_p + hid_p * out_dim) * 2 + (hid_p + out_dim) * 4
    avail = max(budget - weight_bytes - (1 << 20), 1)  # 1 MiB compiler slack
    per_row = (2 * in_dim * 4            # x f32 tile, double-buffered DMA
               + in_dim * 2              # in-kernel bf16 cast of x
               + hid_p * (4 + 2)         # h f32 + its bf16 copy
               + out_dim * 4             # y f32 before the final cast
               + 2 * out_dim * out_bytes)  # output tile, double-buffered DMA
    tile = max(16, min(cap, avail // per_row))
    # v7x megacore: keep >= 2 grid steps when the agent count is large enough
    # that halving the tile still amortizes the per-step overhead.
    if n_agents >= 512:
        tile = min(tile, _round_up((n_agents + 1) // 2, 16))
    if tile >= n_agents:
        return n_agents                 # single full-array block (always legal)
    return max(16, (tile // 16) * 16)   # sublane-aligned row tiles


def _transition_kernel(scale_ref, x_ref, w1_ref, b1_ref, w2_ref, b2_ref, o_ref):
    # bf16 cast of the f32 input tile (VPU, hidden under the DMA pipeline).
    x = x_ref[...].astype(jnp.bfloat16)

    # First linear (bf16 MXU, f32 accumulate) + bias + ReLU in f32.
    h = jnp.dot(x, w1_ref[...], preferred_element_type=jnp.float32)
    h = jnp.maximum(h + b1_ref[...], 0.0)

    # Second linear: cast the activation to bf16 only at the MXU input.
    y = jnp.dot(h.astype(jnp.bfloat16), w2_ref[...],
                preferred_element_type=jnp.float32)
    y = y + b2_ref[...]

    # Learnable scalar argument (arguments['learnable']) held in SMEM.
    o_ref[...] = (y * scale_ref[0]).astype(o_ref.dtype)


def substep_transition_forward(x, w1, b1, w2, b2, scale,
                               out_dtype=None, max_tile_m=None):
    """Fused transition network: scale * (relu(x @ w1 + b1) @ w2 + b2)."""
    n_agents, in_dim = x.shape
    hidden = w1.shape[1]
    out_dim = w2.shape[1]
    out_dtype = x.dtype if out_dtype is None else jnp.dtype(out_dtype)
    out_bytes = jnp.dtype(out_dtype).itemsize

    # Pad only the (tiny) weights' hidden dim to 128 lanes: lane-dense h,
    # full MXU columns, and zero extra HBM traffic on x / output.
    hid_p = _round_up(hidden, 128)

    budget = _vmem_budget()
    cap = 4096 if max_tile_m is None else max_tile_m
    tile_m = _pick_tile_m(n_agents, in_dim, hid_p, out_dim, out_bytes,
                          budget, cap)
    grid = (pl.cdiv(n_agents, tile_m),)   # ragged last tile masked by Pallas

    # Small one-time weight prep (negligible HBM: weights << x / output).
    w1b = jnp.zeros((in_dim, hid_p), jnp.bfloat16).at[:, :hidden].set(
        w1.astype(jnp.bfloat16))
    w2b = jnp.zeros((hid_p, out_dim), jnp.bfloat16).at[:hidden, :].set(
        w2.astype(jnp.bfloat16))
    b1p = jnp.zeros((1, hid_p), jnp.float32).at[0, :hidden].set(
        jnp.reshape(b1, (-1,)).astype(jnp.float32))
    b2p = jnp.reshape(b2, (1, out_dim)).astype(jnp.float32)
    scale_arr = jnp.asarray(scale, jnp.float32).reshape((1,))

    flops = 2 * n_agents * (in_dim * hid_p + hid_p * out_dim)
    bytes_accessed = (x.size * x.dtype.itemsize
                      + w1b.size * 2 + w2b.size * 2 + (hid_p + out_dim) * 4
                      + n_agents * out_dim * out_bytes)

    resident = pl.Buffered(1)   # constant index_map -> one VMEM buffer is enough

    return pl.pallas_call(
        _transition_kernel,
        out_shape=jax.ShapeDtypeStruct((n_agents, out_dim), out_dtype),
        grid=grid,
        in_specs=[
            pl.BlockSpec(memory_space=pltpu.MemorySpace.SMEM),       # scale
            pl.BlockSpec((tile_m, in_dim), lambda i: (i, 0)),        # x tile
            pl.BlockSpec((in_dim, hid_p), lambda i: (0, 0),
                         pipeline_mode=resident),                    # w1
            pl.BlockSpec((1, hid_p), lambda i: (0, 0),
                         pipeline_mode=resident),                    # b1
            pl.BlockSpec((hid_p, out_dim), lambda i: (0, 0),
                         pipeline_mode=resident),                    # w2
            pl.BlockSpec((1, out_dim), lambda i: (0, 0),
                         pipeline_mode=resident),                    # b2
        ],
        out_specs=pl.BlockSpec((tile_m, out_dim), lambda i: (i, 0)),
        compiler_params=pltpu.CompilerParams(
            dimension_semantics=("parallel",),
            vmem_limit_bytes=budget),
        cost_estimate=pl.CostEstimate(
            flops=flops, transcendentals=0, bytes_accessed=bytes_accessed),
    )(scale_arr, x, w1b, b1p, w2b, b2p)


def _reference(x, w1, b1, w2, b2, scale):
    """Same bf16-MXU / f32-accumulate math as the kernel."""
    xb = x.astype(jnp.bfloat16)
    h = jnp.maximum(
        jnp.dot(xb, w1.astype(jnp.bfloat16),
                preferred_element_type=jnp.float32) + b1, 0.0)
    return scale * (jnp.dot(h.astype(jnp.bfloat16), w2.astype(jnp.bfloat16),
                            preferred_element_type=jnp.float32) + b2)


if __name__ == "__main__":
    key = jax.random.PRNGKey(0)

    # ---- Test 1: small square case (single grid step). ----
    n_agents, in_dim, hidden, out_dim = 8, 32, 32, 32
    k_x, k_w1, k_w2 = jax.random.split(key, 3)
    # state['agents']['citizens']['features'] -- the transition input variable
    x = jax.random.normal(k_x, (n_agents, in_dim), dtype=jnp.float32)
    # custom_transition_network weights + the learnable scalar argument
    # from arguments['learnable'].
    w1 = jax.random.normal(k_w1, (in_dim, hidden), dtype=jnp.float32) * 0.1
    b1 = jnp.full((1, hidden), 0.01, dtype=jnp.float32)
    w2 = jax.random.normal(k_w2, (hidden, out_dim), dtype=jnp.float32) * 0.1
    b2 = jnp.full((1, out_dim), -0.02, dtype=jnp.float32)
    scale = jnp.float32(0.5)  # e.g. arguments['learnable']['transition_scale']

    out = jax.jit(substep_transition_forward)(x, w1, b1, w2, b2, scale)
    jax.block_until_ready(out)
    assert out.shape == (n_agents, out_dim)
    ref = _reference(x, w1, b1, w2, b2, scale)
    assert jnp.allclose(out, ref, atol=2e-3, rtol=2e-3), float(
        jnp.max(jnp.abs(out - ref)))
    ref_f32 = scale * (jnp.maximum(x @ w1 + b1, 0.0) @ w2 + b2)
    assert jnp.allclose(out, ref_f32, atol=5e-2, rtol=5e-2)

    # ---- Test 2: ragged row tiles + non-128 feature dims (masked stores). ----
    n2, in2, hid2, out2 = 40, 24, 40, 48
    k_x2, k_w12, k_w22 = jax.random.split(jax.random.PRNGKey(1), 3)
    x2 = jax.random.normal(k_x2, (n2, in2), dtype=jnp.float32)
    w12 = jax.random.normal(k_w12, (in2, hid2), dtype=jnp.float32) * 0.1
    b12 = jax.random.normal(jax.random.PRNGKey(2), (1, hid2), jnp.float32) * 0.01
    w22 = jax.random.normal(k_w22, (hid2, out2), dtype=jnp.float32) * 0.1
    b22 = jax.random.normal(jax.random.PRNGKey(3), (1, out2), jnp.float32) * 0.01
    out2_arr = substep_transition_forward(x2, w12, b12, w22, b22, scale,
                                          max_tile_m=16)  # grid of 3, ragged
    jax.block_until_ready(out2_arr)
    ref2 = _reference(x2, w12, b12, w22, b22, scale)
    assert out2_arr.shape == (n2, out2)
    assert jnp.allclose(out2_arr, ref2, atol=5e-3, rtol=5e-3), float(
        jnp.max(jnp.abs(out2_arr - ref2)))

    # TODO(synk): config-driven 'calibration' tensor aliasing and
    # nn.ParameterDict bookkeeping have no kernel-side equivalent; they only
    # re-register the same scalar parameter.
    print("KERNEL_OK")
</pallas_src>

<mosaic_0001>
module attributes {stable_mosaic.version = 11 : i64} {
  func.func @_transition_kernel(%arg0: i32, %arg1: memref<1xf32, #tpu.memory_space<smem>>, %arg2: memref<8x32xf32, #tpu.memory_space<vmem>>, %arg3: memref<32x128xbf16, #tpu.memory_space<vmem>>, %arg4: memref<1x128xf32, #tpu.memory_space<vmem>>, %arg5: memref<128x32xbf16, #tpu.memory_space<vmem>>, %arg6: memref<1x32xf32, #tpu.memory_space<vmem>>, %arg7: memref<8x32xf32, #tpu.memory_space<vmem>>) attributes {dimension_semantics = [#tpu.dimension_semantics<parallel>], iteration_bounds = array<i64: 1>, scalar_prefetch = 0 : i64, scratch_operands = 0 : i64, tpu.core_type = #tpu.core_type<tc>, window_params = [{transform_indices = @transform_0, window_bounds = array<i64: 1>}, {transform_indices = @transform_1, window_bounds = array<i64: 8, 32>}, {pipeline_mode = #tpu.pipeline_mode<synchronous>, transform_indices = @transform_2, window_bounds = array<i64: 32, 128>}, {pipeline_mode = #tpu.pipeline_mode<synchronous>, transform_indices = @transform_3, window_bounds = array<i64: 1, 128>}, {pipeline_mode = #tpu.pipeline_mode<synchronous>, transform_indices = @transform_4, window_bounds = array<i64: 128, 32>}, {pipeline_mode = #tpu.pipeline_mode<synchronous>, transform_indices = @transform_5, window_bounds = array<i64: 1, 32>}, {transform_indices = @transform_6, window_bounds = array<i64: 8, 32>}]} {
    %c0 = arith.constant 0 : index
    %c0_0 = arith.constant 0 : index
    %0 = vector.load %arg2[%c0, %c0_0] : memref<8x32xf32, #tpu.memory_space<vmem>>, vector<8x32xf32>
    %1 = arith.truncf %0 : vector<8x32xf32> to vector<8x32xbf16>
    %c0_1 = arith.constant 0 : index
    %c0_2 = arith.constant 0 : index
    %2 = vector.load %arg3[%c0_1, %c0_2] : memref<32x128xbf16, #tpu.memory_space<vmem>>, vector<32x128xbf16>
    %cst = arith.constant dense<0.000000e+00> : vector<8x128xf32>
    %3 = tpu.matmul %1, %2, %cst {dimension_numbers = #tpu.dot_dimension_numbers<[1], [0], [0], [1], [0, 0, 1, 1], [], []>} : vector<8x32xbf16>, vector<32x128xbf16>, vector<8x128xf32> -> vector<8x128xf32>
    %c0_3 = arith.constant 0 : index
    %c0_4 = arith.constant 0 : index
    %4 = vector.load %arg4[%c0_3, %c0_4] : memref<1x128xf32, #tpu.memory_space<vmem>>, vector<1x128xf32>
    %5 = vector.broadcast %4 : vector<1x128xf32> to vector<8x128xf32>
    %6 = arith.addf %3, %5 : vector<8x128xf32>
    %cst_5 = arith.constant 0.000000e+00 : f32
    %7 = vector.broadcast %cst_5 : f32 to vector<8x128xf32>
    %8 = arith.maximumf %6, %7 : vector<8x128xf32>
    %9 = arith.truncf %8 : vector<8x128xf32> to vector<8x128xbf16>
    %c0_6 = arith.constant 0 : index
    %c0_7 = arith.constant 0 : index
    %10 = vector.load %arg5[%c0_6, %c0_7] : memref<128x32xbf16, #tpu.memory_space<vmem>>, vector<128x32xbf16>
    %cst_8 = arith.constant dense<0.000000e+00> : vector<8x32xf32>
    %11 = tpu.matmul %9, %10, %cst_8 {dimension_numbers = #tpu.dot_dimension_numbers<[1], [0], [0], [1], [0, 0, 1, 1], [], []>} : vector<8x128xbf16>, vector<128x32xbf16>, vector<8x32xf32> -> vector<8x32xf32>
    %c0_9 = arith.constant 0 : index
    %c0_10 = arith.constant 0 : index
    %12 = vector.load %arg6[%c0_9, %c0_10] : memref<1x32xf32, #tpu.memory_space<vmem>>, vector<1x32xf32>
    %13 = vector.broadcast %12 : vector<1x32xf32> to vector<8x32xf32>
    %14 = arith.addf %11, %13 : vector<8x32xf32>
    %c0_11 = arith.constant 0 : index
    %15 = memref.load %arg1[%c0_11] : memref<1xf32, #tpu.memory_space<smem>>
    %16 = vector.broadcast %15 : f32 to vector<8x32xf32>
    %17 = arith.mulf %14, %16 : vector<8x32xf32>
    %c0_12 = arith.constant 0 : index
    %c0_13 = arith.constant 0 : index
    %18 = vector.load %arg7[%c0_12, %c0_13] : memref<8x32xf32, #tpu.memory_space<vmem>>, vector<8x32xf32>
    tpu.vector_store %arg7[%c0_12, %c0_13], %17 {strides = array<i32>} : memref<8x32xf32, #tpu.memory_space<vmem>>, vector<8x32xf32>,
    return
  }
  func.func @transform_0(%arg0: i32) -> i32 {
    %c0_i32 = arith.constant 0 : i32
    %c0_i32_0 = arith.constant 0 : i32
    return %c0_i32 : i32
  }
  func.func @transform_1(%arg0: i32) -> (i32, i32) {
    %c0_i32 = arith.constant 0 : i32
    %c0_i32_0 = arith.constant 0 : i32
    return %arg0, %c0_i32 : i32, i32
  }
  func.func @transform_2(%arg0: i32) -> (i32, i32) {
    %c0_i32 = arith.constant 0 : i32
    %c0_i32_0 = arith.constant 0 : i32
    %c0_i32_1 = arith.constant 0 : i32
    return %c0_i32, %c0_i32_0 : i32, i32
  }
  func.func @transform_3(%arg0: i32) -> (i32, i32) {
    %c0_i32 = arith.constant 0 : i32
    %c0_i32_0 = arith.constant 0 : i32
    %c0_i32_1 = arith.constant 0 : i32
    return %c0_i32, %c0_i32_0 : i32, i32
  }
  func.func @transform_4(%arg0: i32) -> (i32, i32) {
    %c0_i32 = arith.constant 0 : i32
    %c0_i32_0 = arith.constant 0 : i32
    %c0_i32_1 = arith.constant 0 : i32
    return %c0_i32, %c0_i32_0 : i32, i32
  }
  func.func @transform_5(%arg0: i32) -> (i32, i32) {
    %c0_i32 = arith.constant 0 : i32
    %c0_i32_0 = arith.constant 0 : i32
    %c0_i32_1 = arith.constant 0 : i32
    return %c0_i32, %c0_i32_0 : i32, i32
  }
  func.func @transform_6(%arg0: i32) -> (i32, i32) {
    %c0_i32 = arith.constant 0 : i32
    %c0_i32_0 = arith.constant 0 : i32
    return %arg0, %c0_i32 : i32, i32
  }
}

</mosaic_0001>

<llo_original>
// kernel: substep_transition_forward.1
$region0: #{substep_transition_forward.1}
  #allocation0 [shape = 'u32[]', space=smem, size = 0x4, offset = 0x4, fixed_abs, tag = 'smem constant byte address 0x4 - core index']
  #allocation1 [shape = 'u32[144,128]{1,0:T(1,128)}', space=vmem, size = 0x12000, scoped, tag = 'internal scratch']
  #allocation2 [shape = 'f32[1]{0:T(128)S(6)}', space=smem, size = 0x200, scoped, tag = 'scoped memory for substep_transition_forward.1']
  %s0 = inlined_call_operand.<no memory space> [shape: f32[1], index: 0, kind: input, shape index: {}]
  %s1 = inlined_call_operand.vmem [shape: f32[8,32], index: 1, kind: input, shape index: {}]
  %s2 = inlined_call_operand.vmem [shape: bf16[32,128], index: 2, kind: input, shape index: {}]
  %s3 = inlined_call_operand.vmem [shape: f32[1,128], index: 3, kind: input, shape index: {}]
  %s4 = inlined_call_operand.vmem [shape: bf16[128,32], index: 4, kind: input, shape index: {}]
  %s5 = inlined_call_operand.vmem [shape: f32[1,32], index: 5, kind: input, shape index: {}]
  %s6 = inlined_call_operand.hbm [shape: f32[8,32], index: 6, kind: output, shape index: {}]
  %s7 = sld [smem:[#allocation0]]
  $region34: #{substep_transition_forward.1} parent=0
    _
  %s9 = ssub.s32 1, %s7
  %s10 = scalar_select 0, %s9, %s7
  %11 = sst [smem:[#allocation2]] %s0
  $region1: #{substep_transition_forward.1} parent=0
    #allocation3 [shape = 'u8[4096]{0}', space=vmem, size = 0x1000, scoped, tag = 'output window, operand 0, single buffered']
    #allocation4 [shape = 's32[1]{0}', space=sflag, size = 0x4, scoped, tag = 'scoped memory for substep_transition_forward.1']
    %12 = vsyncpa [#allocation4], 0
    // Predicated region
    $region2: #{substep_transition_forward.1} parent=1 // pred_check
      _
    $region3: #{substep_transition_forward.1} parent=1 // pred_check_branch
      %14 = sbr.rel (0) target = $region5
    $region4: #{substep_transition_forward.1} parent=1 // pred_region
      _
    $region5: #{substep_transition_forward.1} parent=1 // pred_fallthru
      _
    // Predicated region
    $region6: #{substep_transition_forward.1} parent=1 // pred_check
      _
    $region7: #{substep_transition_forward.1} parent=1 // pred_check_branch
      %16 = sbr.rel (0) target = $region9
    $region8: #{substep_transition_forward.1} parent=1 // pred_region
      _
    $region9: #{substep_transition_forward.1} parent=1 // pred_fallthru
      _
    // Predicated region
    $region10: #{substep_transition_forward.1} parent=1 // pred_check
      _
    $region11: #{substep_transition_forward.1} parent=1 // pred_check_branch
      %18 = sbr.rel (0) target = $region13
    $region12: #{substep_transition_forward.1} parent=1 // pred_region
      _
    $region13: #{substep_transition_forward.1} parent=1 // pred_fallthru
      _
    // Predicated region
    $region14: #{substep_transition_forward.1} parent=1 // pred_check
      _
    $region15: #{substep_transition_forward.1} parent=1 // pred_check_branch
      %20 = sbr.rel (0) target = $region17
    $region16: #{substep_transition_forward.1} parent=1 // pred_region
      _
    $region17: #{substep_transition_forward.1} parent=1 // pred_fallthru
      _
    // Predicated region
    $region18: #{substep_transition_forward.1} parent=1 // pred_check
      _
    $region19: #{substep_transition_forward.1} parent=1 // pred_check_branch
      %22 = sbr.rel (0) target = $region21
    $region20: #{substep_transition_forward.1} parent=1 // pred_region
      _
    $region21: #{substep_transition_forward.1} parent=1 // pred_fallthru
      _
    // Predicated region
    $region22: #{substep_transition_forward.1} parent=1 // pred_check
      _
    $region23: #{substep_transition_forward.1} parent=1 // pred_check_branch
      %24 = sbr.rel (0) target = $region25
    $region24: #{substep_transition_forward.1} parent=1 // pred_region
      _
    $region25: #{substep_transition_forward.1} parent=1 // pred_fallthru
      _
    %v26 = vld [vmem:[%s1] sm:$0xff]
    %v27 = vpack.c.bf16 %v26, %v26
    %v28 = vld [vmem:[%s2] sm:$0xf]
    %v29 = vld [vmem:[%s2 + $0x4] sm:$0xf]
    %v30 = vld [vmem:[%s2 + $0x8] sm:$0xf]
    %v31 = vld [vmem:[%s2 + $0xc] sm:$0xf]
    %v32 = vld [vmem:[%s3] sm:$0x1]
    %v34 = vlaneseq
    %v35 = vshrl.u32 %v34, 7
    %v36 = vsub.s32 0, %v35
    %v37 = vrot.slane %v32, %v36
    %v43 = vunpack.c.l.b16 %v28
    %v44 = vunpack.c.l.b16 %v29
    %v45 = vunpack.c.l.b16 %v30
    %v46 = vunpack.c.l.b16 %v31
    %v47 = vpack.c.b16 %v44, %v43
    %v48 = vpack.c.b16 %v46, %v45
    %vm51 = vcmask 261120
    %v53 = vsel %vm51, %v27, 0
    %55 = vmatprep.subr.bf16.mxu0 0
    %56 = vmatpush1.bf16.msra.mxu0 %v47
    %57 = vmatprep.subr.bf16.mxu0 0
    %58 = vmatpush1.bf16.msra.mxu0 %v48
    %59 = vmatprep.subr.bf16.mxu0 0
    %60 = vmatpush1.bf16.msra.mxu0 0
    %61 = vmatprep.subr.bf16.mxu0 0
    %62 = vmatpush1.bf16.msra.mxu0 0
    %63 = vmatprep.subr.bf16.mxu0 0
    %64 = vmatpush1.bf16.msra.mxu0 0
    %65 = vmatprep.subr.bf16.mxu0 0
    %66 = vmatpush1.bf16.msra.mxu0 0
    %67 = vmatprep.subr.bf16.mxu0 0
    %68 = vmatpush1.bf16.msra.mxu0 0
    %69 = vmatprep.subr.bf16.mxu0 0
    %70 = vmatpush1.bf16.msra.mxu0 0
    %71 = vmatprep.subr.bf16.mxu0 0
    %72 = vmatpush1.bf16.msra.mxu0 0
    %73 = vmatprep.subr.bf16.mxu0 0
    %74 = vmatpush1.bf16.msra.mxu0 0
    %75 = vmatprep.subr.bf16.mxu0 0
    %76 = vmatpush1.bf16.msra.mxu0 0
    %77 = vmatprep.subr.bf16.mxu0 0
    %78 = vmatpush1.bf16.msra.mxu0 0
    %79 = vmatprep.subr.bf16.mxu0 0
    %80 = vmatpush1.bf16.msra.mxu0 0
    %81 = vmatprep.subr.bf16.mxu0 0
    %82 = vmatpush1.bf16.msra.mxu0 0
    %83 = vmatprep.subr.bf16.mxu0 0
    %84 = vmatpush1.bf16.msra.mxu0 0
    %85 = vmatprep.subr.bf16.mxu0 0
    %86 = vmatpush1.bf16.msra.mxu0 0
    %87 = vmatprep.mubr.bf16.mxu0 0
    %88 = vmatmul.mubr.bf16.gmra.mrb[0].mxu0 %v53
    %v89 = vpop.f32.mrb[0].mxu0
    %v90 = vadd.f32 %v37, %v89
    %v91 = vpop.f32.mrb[0].mxu0
    %v92 = vpop.f32.mrb[0].mxu0
    %v93 = vpop.f32.mrb[0].mxu0
    %94 = vdwg.mxu0
    %v95 = vmax.f32 %v90, 0.0
    %v96 = vpack.c.bf16 %v95, %v95
    %v97 = vld [vmem:[%s4] sm:$0xf]
    %v98 = vld [vmem:[%s4 + $0x4] sm:$0xf]
    %v99 = vld [vmem:[%s4 + $0x8] sm:$0xf]
    %v100 = vld [vmem:[%s4 + $0xc] sm:$0xf]
    %v101 = vld [vmem:[%s4 + $0x10] sm:$0xf]
    %v102 = vld [vmem:[%s4 + $0x14] sm:$0xf]
    %v103 = vld [vmem:[%s4 + $0x18] sm:$0xf]
    %v104 = vld [vmem:[%s4 + $0x1c] sm:$0xf]
    %v105 = vld [vmem:[%s4 + $0x20] sm:$0xf]
    %v106 = vld [vmem:[%s4 + $0x24] sm:$0xf]
    %v107 = vld [vmem:[%s4 + $0x28] sm:$0xf]
    %v108 = vld [vmem:[%s4 + $0x2c] sm:$0xf]
    %v109 = vld [vmem:[%s4 + $0x30] sm:$0xf]
    %v110 = vld [vmem:[%s4 + $0x34] sm:$0xf]
    %v111 = vld [vmem:[%s4 + $0x38] sm:$0xf]
    %v112 = vld [vmem:[%s4 + $0x3c] sm:$0xf]
    %v113 = vld [vmem:[%s5] sm:$0x1]
    %v115 = vlaneseq
    %v116 = vshrl.u32 %v115, 7
    %v117 = vsub.s32 0, %v116
    %v118 = vrot.slane %v113, %v117
    %v136 = vunpack.c.l.b16 %v97
    %v137 = vunpack.c.l.b16 %v98
    %v138 = vunpack.c.l.b16 %v99
    %v139 = vunpack.c.l.b16 %v100
    %v140 = vunpack.c.l.b16 %v101
    %v141 = vunpack.c.l.b16 %v102
    %v142 = vunpack.c.l.b16 %v103
    %v143 = vunpack.c.l.b16 %v104
    %v144 = vunpack.c.l.b16 %v105
    %v145 = vunpack.c.l.b16 %v106
    %v146 = vunpack.c.l.b16 %v107
    %v147 = vunpack.c.l.b16 %v108
    %v148 = vunpack.c.l.b16 %v109
    %v149 = vunpack.c.l.b16 %v110
    %v150 = vunpack.c.l.b16 %v111
    %v151 = vunpack.c.l.b16 %v112
    %v152 = vpack.c.b16 %v137, %v136
    %v153 = vpack.c.b16 %v139, %v138
    %v154 = vpack.c.b16 %v141, %v140
    %v155 = vpack.c.b16 %v143, %v142
    %v156 = vpack.c.b16 %v145, %v144
    %v157 = vpack.c.b16 %v147, %v146
    %v158 = vpack.c.b16 %v149, %v148
    %v159 = vpack.c.b16 %v151, %v150
    %168 = vmatprep.subr.bf16.mxu0 0
    %169 = vmatpush1.bf16.msra.mxu0 %v152
    %170 = vmatprep.subr.bf16.mxu0 0
    %171 = vmatpush1.bf16.msra.mxu0 %v153
    %172 = vmatprep.subr.bf16.mxu0 0
    %173 = vmatpush1.bf16.msra.mxu0 %v154
    %174 = vmatprep.subr.bf16.mxu0 0
    %175 = vmatpush1.bf16.msra.mxu0 %v155
    %176 = vmatprep.subr.bf16.mxu0 0
    %177 = vmatpush1.bf16.msra.mxu0 %v156
    %178 = vmatprep.subr.bf16.mxu0 0
    %179 = vmatpush1.bf16.msra.mxu0 %v157
    %180 = vmatprep.subr.bf16.mxu0 0
    %181 = vmatpush1.bf16.msra.mxu0 %v158
    %182 = vmatprep.subr.bf16.mxu0 0
    %183 = vmatpush1.bf16.msra.mxu0 %v159
    %184 = vmatprep.subr.bf16.mxu0 0
    %185 = vmatpush1.bf16.msra.mxu0 0
    %186 = vmatprep.subr.bf16.mxu0 0
    %187 = vmatpush1.bf16.msra.mxu0 0
    %188 = vmatprep.subr.bf16.mxu0 0
    %189 = vmatpush1.bf16.msra.mxu0 0
    %190 = vmatprep.subr.bf16.mxu0 0
    %191 = vmatpush1.bf16.msra.mxu0 0
    %192 = vmatprep.subr.bf16.mxu0 0
    %193 = vmatpush1.bf16.msra.mxu0 0
    %194 = vmatprep.subr.bf16.mxu0 0
    %195 = vmatpush1.bf16.msra.mxu0 0
    %196 = vmatprep.subr.bf16.mxu0 0
    %197 = vmatpush1.bf16.msra.mxu0 0
    %198 = vmatprep.subr.bf16.mxu0 0
    %199 = vmatpush1.bf16.msra.mxu0 0
    %200 = vmatprep.mubr.bf16.mxu0 0
    %201 = vmatmul.mubr.bf16.gmra.mrb[0].mxu0 %v96
    %v202 = vpop.f32.mrb[0].mxu0
    %v203 = vadd.f32 %v118, %v202
    %v204 = vpop.f32.mrb[0].mxu0
    %v205 = vpop.f32.mrb[0].mxu0
    %v206 = vpop.f32.mrb[0].mxu0
    %207 = vdwg.mxu0
    %s208 = sld [smem:[#allocation2]]
    %v209 = vstv %s208
    %v210 = vmul.f32 %v203, %v209
    %211 = vst.msk [vmem:[#allocation3] sm:$0xff] %vm51, %v210
    // Predicated region
    $region26: #{substep_transition_forward.1} parent=1 // pred_check
      _
    $region27: #{substep_transition_forward.1} parent=1 // pred_check_branch
      %213 = sbr.rel (0) target = $region29
    $region28: #{substep_transition_forward.1} parent=1 // pred_region
      %s215 = ssub.s32 128, 128
      %216 = vsyncadd [#allocation4], %s215
      %s218 = sshll.u32 [#allocation3], 4
      %s219 = int_to_ptr.vmem [resolvable:$true] %s218
      %221 = dma.vmem_to_hbm [thread:$0]  %s219, 128, %s6, [#allocation4]
    $region29: #{substep_transition_forward.1} parent=1 // pred_fallthru
      _
    // Predicated region
    $region30: #{substep_transition_forward.1} parent=1 // pred_check
      _
    $region31: #{substep_transition_forward.1} parent=1 // pred_check_branch
      %223 = sbr.rel (0) target = $region33
    $region32: #{substep_transition_forward.1} parent=1 // pred_region
      %224 = dma.done [#allocation4], 128
    $region33: #{substep_transition_forward.1} parent=1 // pred_fallthru
      _
    %225 = vsyncpa [#allocation4], 1

</llo_original>
